<compile_context>
chip_gen: v5e
topology: v5e:2x2
jax: 0.10.0
libtpu: 0.0.40
codegen_flags: <defaults>
</compile_context>

<pallas_src>
import functools

import jax
import jax.numpy as jnp
from jax import lax
from jax.experimental import pallas as pl
from jax.experimental.pallas import tpu as pltpu


def _round_up(x, m):
    return -(-x // m) * m


def _vmem_limit_bytes():
    """Scoped-VMEM limit: ~3/4 of physical VMEM, capped at 96 MiB.
    (v5e/v6e: 128 MiB physical -> 96 MiB; v7x: 64 MiB -> 48 MiB.)"""
    phys = 64 * 1024 * 1024
    try:
        info = pltpu.get_tpu_info()
        phys = int(getattr(info, "vmem_capacity_bytes", phys)) or phys
    except Exception:
        pass
    return min(96 * 1024 * 1024, (phys * 3) // 4)


def _choose_tk(m, k, itemsize, vmem_limit, resident_bytes):
    """Pick the K tile: as large as the VMEM budget allows (double-buffered F
    input + in-kernel mask/cast temporaries), preferring tiles that divide
    round_up(k, 128) so the tail tile is (nearly) full."""
    kp128 = _round_up(k, 128)
    headroom = 2 * 1024 * 1024
    avail = max(vmem_limit - resident_bytes - headroom, 8 * 1024 * 1024)
    per_block = avail // 4  # 2x double-buffer + masked/cast temporaries
    tk_budget = max(128, (per_block // (max(m, 8) * itemsize)) // 128 * 128)
    if tk_budget >= kp128:
        return k  # single full-width tile (block == full dim, no tail mask)
    tk = tk_budget
    t = tk
    while t >= 128 and 2 * t > tk:
        if kp128 % t == 0:
            return t
        t -= 128
    return tk


def _masked_cast(f, kk, k, tk, compute_dtype):
    """Zero the out-of-bounds columns of a ragged last K tile (static no-op
    when k % tk == 0), then cast to the MXU compute dtype."""
    if k % tk != 0:
        col = lax.broadcasted_iota(jnp.int32, f.shape, 1)
        f = jnp.where(col < (k - kk * tk), f, jnp.array(0, f.dtype))
    if f.dtype != compute_dtype:
        f = f.astype(compute_dtype)
    return f


# ---------------------------------------------------------------------------
# Kernel 1: Gram matrix (used once at init for the target feature).
#   K-tiled NT matmul accumulated directly into the resident output block.
# ---------------------------------------------------------------------------
def _gram_kernel(f_ref, g_ref, *, k, tk, inv_norm, compute_dtype):
    kk = pl.program_id(0)

    @pl.when(kk == 0)
    def _init():
        g_ref[...] = jnp.zeros_like(g_ref)

    f = _masked_cast(f_ref[...], kk, k, tk, compute_dtype)
    g_ref[...] += lax.dot_general(
        f, f, dimension_numbers=(((1,), (1,)), ((), ())),
        preferred_element_type=jnp.float32)

    @pl.when(kk == pl.num_programs(0) - 1)
    def _finalize():
        g_ref[...] = g_ref[...] * inv_norm


def gram_matrix(x, *, compute_dtype=jnp.bfloat16):
    """x: NCHW -> (M, M) f32 Gram matrix, M = N*C (matches torch gram_matrix)."""
    a, b, c, d = x.shape
    m, k = a * b, c * d
    f = x.reshape(m, k)  # contiguous view; no HBM copy, no pad
    itemsize = jnp.dtype(f.dtype).itemsize
    vmem_limit = _vmem_limit_bytes()
    resident = 2 * _round_up(m, 8) * _round_up(max(m, 8), 128) * 4
    tk = _choose_tk(m, k, itemsize, vmem_limit, resident)
    n_k = pl.cdiv(k, tk)
    inv_norm = 1.0 / float(m * k)  # = 1 / (a*b*c*d)

    return pl.pallas_call(
        functools.partial(_gram_kernel, k=k, tk=tk, inv_norm=inv_norm,
                          compute_dtype=compute_dtype),
        out_shape=jax.ShapeDtypeStruct((m, m), jnp.float32),
        grid=(n_k,),
        in_specs=[pl.BlockSpec((m, tk), lambda kk: (0, kk))],
        out_specs=pl.BlockSpec((m, m), lambda kk: (0, 0)),
        compiler_params=pltpu.CompilerParams(
            dimension_semantics=("arbitrary",),
            vmem_limit_bytes=vmem_limit),
        cost_estimate=pl.CostEstimate(
            flops=2 * m * m * k, transcendentals=0,
            bytes_accessed=m * k * itemsize + m * m * 4),
    )(f)


# ---------------------------------------------------------------------------
# Kernel 2 (fused forward): Gram(x) accumulated in a VMEM scratch across K
# tiles; the target Gram stays in HBM and is DMA'd in only for the epilogue,
# where the MSE is reduced to a single SMEM scalar.  G(x) never touches HBM.
# ---------------------------------------------------------------------------
def _style_loss_kernel(f_ref, t_hbm, loss_ref, acc_ref, t_vmem, t_sem, *,
                       k, tk, n_k, inv_norm, inv_count, compute_dtype):
    kk = pl.program_id(0)

    @pl.when(kk == 0)
    def _init():
        acc_ref[...] = jnp.zeros_like(acc_ref)

    # Target Gram is only needed in the epilogue: fetch it late so its DMA
    # overlaps the last matmul step instead of delaying the first.
    @pl.when(kk == max(n_k - 2, 0))
    def _prefetch_target():
        pltpu.make_async_copy(t_hbm, t_vmem, t_sem).start()

    f = _masked_cast(f_ref[...], kk, k, tk, compute_dtype)
    acc_ref[...] += lax.dot_general(
        f, f, dimension_numbers=(((1,), (1,)), ((), ())),
        preferred_element_type=jnp.float32)

    @pl.when(kk == n_k - 1)
    def _finalize():
        pltpu.make_async_copy(t_hbm, t_vmem, t_sem).wait()
        diff = acc_ref[...] * inv_norm - t_vmem[...]
        loss_ref[0, 0] = jnp.sum(diff * diff) * inv_count


def style_mse_loss(x, target_gram, *, compute_dtype=jnp.bfloat16):
    a, b, c, d = x.shape
    m, k = a * b, c * d
    if target_gram.shape != (m, m):
        raise ValueError(
            f"target Gram shape {target_gram.shape} does not match input "
            f"M = N*C = {m}")
    f = x.reshape(m, k)  # contiguous view; no HBM copy, no pad
    itemsize = jnp.dtype(f.dtype).itemsize
    vmem_limit = _vmem_limit_bytes()
    resident = 2 * _round_up(m, 8) * _round_up(max(m, 8), 128) * 4  # acc + target scratch
    tk = _choose_tk(m, k, itemsize, vmem_limit, resident)
    n_k = pl.cdiv(k, tk)
    inv_norm = 1.0 / float(m * k)
    inv_count = 1.0 / float(m * m)  # MSE mean over the true M*M entries

    out = pl.pallas_call(
        functools.partial(_style_loss_kernel, k=k, tk=tk, n_k=n_k,
                          inv_norm=inv_norm, inv_count=inv_count,
                          compute_dtype=compute_dtype),
        out_shape=jax.ShapeDtypeStruct((1, 1), jnp.float32),
        grid=(n_k,),
        in_specs=[pl.BlockSpec((m, tk), lambda kk: (0, kk)),
                  pl.BlockSpec(memory_space=pl.ANY)],       # target stays in HBM
        out_specs=pl.BlockSpec(memory_space=pltpu.SMEM),
        scratch_shapes=[pltpu.VMEM((m, m), jnp.float32),     # Gram(x) accumulator
                        pltpu.VMEM((m, m), jnp.float32),     # target landing buffer
                        pltpu.SemaphoreType.DMA(())],
        compiler_params=pltpu.CompilerParams(
            dimension_semantics=("arbitrary",),
            vmem_limit_bytes=vmem_limit),
        cost_estimate=pl.CostEstimate(
            flops=2 * m * m * k + 3 * m * m, transcendentals=0,
            bytes_accessed=m * k * itemsize + m * m * 4 + 4),
    )(f, target_gram.astype(jnp.float32))
    return out[0, 0]


# ---------------------------------------------------------------------------
# StyleLoss module (forward pass only; returns input unchanged, stores .loss)
# ---------------------------------------------------------------------------
class StyleLoss:
    def __init__(self, target_feature, compute_dtype=jnp.bfloat16):
        a, b, _, _ = target_feature.shape
        self._m = a * b
        self._compute_dtype = compute_dtype
        # Target Gram ("detached" == plain constant), true (M, M) shape.
        self.target = gram_matrix(target_feature, compute_dtype=compute_dtype)
        self.loss = None

    def __call__(self, x):
        a, b, _, _ = x.shape
        if a * b != self._m:
            raise ValueError(
                f"StyleLoss: input N*C={a * b} does not match the target "
                f"feature N*C={self._m}")
        self.loss = style_mse_loss(x, self.target,
                                   compute_dtype=self._compute_dtype)
        return x


# ---------------------------------------------------------------------------
if __name__ == "__main__":
    key = jax.random.PRNGKey(0)
    k_t, k_x = jax.random.split(key)

    # Small NCHW shapes: batch=2, channels=4, spatial=16
    target_feature = jax.random.normal(k_t, (2, 4, 16, 16), dtype=jnp.float32)
    x = jax.random.normal(k_x, (2, 4, 16, 16), dtype=jnp.float32)

    # Pure-JAX reference (correctness gate, not part of the kernel)
    def gram_ref(v):
        a, b, c, d = v.shape
        f = v.reshape(a * b, c * d)
        g = jnp.dot(f, f.T, precision=lax.Precision.HIGHEST)
        return g / (a * b * c * d)

    g_ref_t = gram_ref(target_feature)
    g_ref_x = gram_ref(x)
    loss_ref = jnp.mean((g_ref_x - g_ref_t) ** 2)

    # Exact-parity path (f32 on the MXU) -- tight tolerance.
    mod_f32 = StyleLoss(target_feature, compute_dtype=jnp.float32)
    out = mod_f32(x)
    jax.block_until_ready(out)
    loss_f32 = jax.block_until_ready(mod_f32.loss)
    assert out.shape == x.shape and jnp.allclose(out, x)
    assert jnp.allclose(mod_f32.target, g_ref_t, atol=1e-4, rtol=1e-3)
    assert jnp.allclose(loss_f32, loss_ref, atol=1e-6, rtol=1e-3)

    # Default fast path (bf16 inputs on the MXU, f32 accumulation).
    mod = StyleLoss(target_feature)
    out = mod(x)
    jax.block_until_ready(out)
    loss_bf16 = jax.block_until_ready(mod.loss)
    assert out.shape == x.shape and jnp.allclose(out, x)
    assert jnp.allclose(mod.target, g_ref_t, atol=2e-3, rtol=2e-2)
    assert jnp.allclose(loss_bf16, loss_ref, atol=1e-6, rtol=5e-2)

    print("KERNEL_OK")
</pallas_src>

<mosaic_0001>
module attributes {stable_mosaic.version = 11 : i64} {
  func.func @_gram_kernel(%arg0: i32, %arg1: memref<8x256xf32, #tpu.memory_space<vmem>>, %arg2: memref<8x8xf32, #tpu.memory_space<vmem>>) attributes {dimension_semantics = [#tpu.dimension_semantics<arbitrary>], iteration_bounds = array<i64: 1>, scalar_prefetch = 0 : i64, scratch_operands = 0 : i64, tpu.core_type = #tpu.core_type<tc>, window_params = [{transform_indices = @transform_0, window_bounds = array<i64: 8, 256>}, {pipeline_mode = #tpu.pipeline_mode<synchronous>, transform_indices = @transform_1, window_bounds = array<i64: 8, 8>}]} {
    %c0_i32 = arith.constant 0 : i32
    %0 = arith.cmpi eq, %arg0, %c0_i32 : i32
    %1 = arith.extui %0 : i1 to i32
    %c0_i32_0 = arith.constant 0 : i32
    %2 = arith.cmpi ne, %1, %c0_i32_0 : i32
    scf.if %2 {
      %cst_8 = arith.constant 0.000000e+00 : f32
      %11 = vector.broadcast %cst_8 : f32 to vector<8x8xf32>
      %c0_9 = arith.constant 0 : index
      %c0_10 = arith.constant 0 : index
      %12 = vector.load %arg2[%c0_9, %c0_10] : memref<8x8xf32, #tpu.memory_space<vmem>>, vector<8x8xf32>
      tpu.vector_store %arg2[%c0_9, %c0_10], %11 {strides = array<i32>} : memref<8x8xf32, #tpu.memory_space<vmem>>, vector<8x8xf32>,
    } else {
    }
    %c0 = arith.constant 0 : index
    %c0_1 = arith.constant 0 : index
    %3 = vector.load %arg1[%c0, %c0_1] : memref<8x256xf32, #tpu.memory_space<vmem>>, vector<8x256xf32>
    %c0_2 = arith.constant 0 : index
    %c0_3 = arith.constant 0 : index
    %4 = vector.load %arg2[%c0_2, %c0_3] : memref<8x8xf32, #tpu.memory_space<vmem>>, vector<8x8xf32>
    %cst = arith.constant dense<0.000000e+00> : vector<8x8xf32>
    %5 = tpu.matmul %3, %3, %cst {dimension_numbers = #tpu.dot_dimension_numbers<[1], [1], [0], [0], [0, 0, 1, 0], [], []>} : vector<8x256xf32>, vector<8x256xf32>, vector<8x8xf32> -> vector<8x8xf32>
    %6 = arith.addf %4, %5 : vector<8x8xf32>
    %c0_4 = arith.constant 0 : index
    %c0_5 = arith.constant 0 : index
    %7 = vector.load %arg2[%c0_4, %c0_5] : memref<8x8xf32, #tpu.memory_space<vmem>>, vector<8x8xf32>
    tpu.vector_store %arg2[%c0_4, %c0_5], %6 {strides = array<i32>} : memref<8x8xf32, #tpu.memory_space<vmem>>, vector<8x8xf32>,
    %c0_i32_6 = arith.constant 0 : i32
    %8 = arith.cmpi eq, %arg0, %c0_i32_6 : i32
    %9 = arith.extui %8 : i1 to i32
    %c0_i32_7 = arith.constant 0 : i32
    %10 = arith.cmpi ne, %9, %c0_i32_7 : i32
    scf.if %10 {
      %c0_8 = arith.constant 0 : index
      %c0_9 = arith.constant 0 : index
      %11 = vector.load %arg2[%c0_8, %c0_9] : memref<8x8xf32, #tpu.memory_space<vmem>>, vector<8x8xf32>
      %cst_10 = arith.constant 4.8828125E-4 : f32
      %12 = vector.broadcast %cst_10 : f32 to vector<8x8xf32>
      %13 = arith.mulf %11, %12 : vector<8x8xf32>
      %c0_11 = arith.constant 0 : index
      %c0_12 = arith.constant 0 : index
      %14 = vector.load %arg2[%c0_11, %c0_12] : memref<8x8xf32, #tpu.memory_space<vmem>>, vector<8x8xf32>
      tpu.vector_store %arg2[%c0_11, %c0_12], %13 {strides = array<i32>} : memref<8x8xf32, #tpu.memory_space<vmem>>, vector<8x8xf32>,
    } else {
    }
    return
  }
  func.func @transform_0(%arg0: i32) -> (i32, i32) {
    %c0_i32 = arith.constant 0 : i32
    %c0_i32_0 = arith.constant 0 : i32
    return %c0_i32, %arg0 : i32, i32
  }
  func.func @transform_1(%arg0: i32) -> (i32, i32) {
    %c0_i32 = arith.constant 0 : i32
    %c0_i32_0 = arith.constant 0 : i32
    %c0_i32_1 = arith.constant 0 : i32
    return %c0_i32, %c0_i32_0 : i32, i32
  }
}

</mosaic_0001>

<llo_original>
// kernel: tpu_custom_call.1
$region0: #{tpu_custom_call.1}
  #allocation0 [shape = 'u32[]', space=smem, size = 0x4, offset = 0x4, fixed_abs, tag = 'smem constant byte address 0x4 - core index']
  #allocation1 [shape = 'u32[72,128]{1,0:T(1,128)}', space=vmem, size = 0x9000, scoped, tag = 'internal scratch']
  %s0 = inlined_call_operand.hbm [shape: f32[8,256], index: 0, kind: input, shape index: {}]
  %s1 = inlined_call_operand.hbm [shape: f32[8,8], index: 1, kind: output, shape index: {}]
  %s2 = sld [smem:[#allocation0]]
  $region26: #{tpu_custom_call.1} parent=0
    _
  %s4 = ssub.s32 1, %s2
  %s5 = scalar_select 0, %s4, %s2
  $region1: #{tpu_custom_call.1} parent=0
    #allocation2 [shape = 'u8[8192]{0}', space=vmem, size = 0x2000, scoped, tag = 'input window, operand 0, single buffered']
    #allocation3 [shape = 's32[1]{0}', space=sflag, size = 0x4, scoped, tag = 'scoped memory for tpu_custom_call.1']
    #allocation4 [shape = 's32[1]{0}', space=sflag, size = 0x4, scoped, tag = 'scoped memory for tpu_custom_call.1']
    #allocation5 [shape = 'u8[4096]{0}', space=vmem, size = 0x1000, scoped, tag = 'output window, operand 0, single buffered']
    %6 = vsyncpa [#allocation3], 0
    %7 = vsyncpa [#allocation4], 0
    // Predicated region
    $region2: #{tpu_custom_call.1} parent=1 // pred_check
      _
    $region3: #{tpu_custom_call.1} parent=1 // pred_check_branch
      %9 = sbr.rel (0) target = $region5
    $region4: #{tpu_custom_call.1} parent=1 // pred_region
      %11 = vsyncadd [#allocation3], 0
      %s13 = sshll.u32 %s0, 4
      %s14 = int_to_ptr.hbm [resolvable:$true] %s13
      %s15 = sshll.u32 [#allocation2], 4
      %s16 = int_to_ptr.vmem [resolvable:$true] %s15
      %18 = dma.hbm_to_vmem [thread:$0]  %s14, 256, %s16, [#allocation3]
    $region5: #{tpu_custom_call.1} parent=1 // pred_fallthru
      _
    // Predicated region
    $region6: #{tpu_custom_call.1} parent=1 // pred_check
      _
    $region7: #{tpu_custom_call.1} parent=1 // pred_check_branch
      %20 = sbr.rel (0) target = $region9
    $region8: #{tpu_custom_call.1} parent=1 // pred_region
      %22 = dma.done [#allocation3], 256
    $region9: #{tpu_custom_call.1} parent=1 // pred_fallthru
      _
    %p23 = scmp.eq.s32.totalorder 0, 0
    // Predicated region
    $region10: #{tpu_custom_call.1} parent=1 // pred_check
      %p24 = pneg %p23
    $region11: #{tpu_custom_call.1} parent=1 // pred_check_branch
      %26 = sbr.rel (%p24) target = $region13
    $region12: #{tpu_custom_call.1} parent=1 // pred_region
      %vm27 = vcmask 64512
      %28 = vst.msk [vmem:[#allocation5] sm:$0xff] %vm27, 0.0
    $region13: #{tpu_custom_call.1} parent=1 // pred_fallthru
      _
    %v29 = vld [vmem:[#allocation2] sm:$0xff]
    %v30 = vld [vmem:[#allocation2 + $0x8] sm:$0xff]
    %v31 = vld [vmem:[#allocation5] sm:$0xff]
    %32 = vmatpush.xpose.msra.mxu0 0.0
    %33 = vmatpush.xpose.msra.mxu0 0.0
    %34 = vmatpush.xpose.msra.mxu0 0.0
    %35 = vmatpush.xpose.msra.mxu0 0.0
    %36 = vmatpush.xpose.msra.mxu0 0.0
    %37 = vmatpush.xpose.msra.mxu0 0.0
    %38 = vmatpush.xpose.msra.mxu0 0.0
    %39 = vmatpush.xpose.msra.mxu0 0.0
    %40 = vmatpush.xpose.msra.mxu0 0.0
    %41 = vmatpush.xpose.msra.mxu0 0.0
    %42 = vmatpush.xpose.msra.mxu0 0.0
    %43 = vmatpush.xpose.msra.mxu0 0.0
    %44 = vmatpush.xpose.msra.mxu0 0.0
    %45 = vmatpush.xpose.msra.mxu0 0.0
    %46 = vmatpush.xpose.msra.mxu0 0.0
    %47 = vmatpush.xpose.msra.mxu0 %v29
    %48 = vmatmul.f32.gmra.mxu0 %v29
    %v49 = vpop.f32.mrf.mxu0
    %v50 = vadd.f32 0.0, %v49
    %51 = vdwg.mxu0
    %52 = vmatpush.xpose.msra.mxu0 0.0
    %53 = vmatpush.xpose.msra.mxu0 0.0
    %54 = vmatpush.xpose.msra.mxu0 0.0
    %55 = vmatpush.xpose.msra.mxu0 0.0
    %56 = vmatpush.xpose.msra.mxu0 0.0
    %57 = vmatpush.xpose.msra.mxu0 0.0
    %58 = vmatpush.xpose.msra.mxu0 0.0
    %59 = vmatpush.xpose.msra.mxu0 0.0
    %60 = vmatpush.xpose.msra.mxu0 0.0
    %61 = vmatpush.xpose.msra.mxu0 0.0
    %62 = vmatpush.xpose.msra.mxu0 0.0
    %63 = vmatpush.xpose.msra.mxu0 0.0
    %64 = vmatpush.xpose.msra.mxu0 0.0
    %65 = vmatpush.xpose.msra.mxu0 0.0
    %66 = vmatpush.xpose.msra.mxu0 0.0
    %67 = vmatpush.xpose.msra.mxu0 %v30
    %68 = vmatmul.f32.gmra.mxu0 %v30
    %v69 = vpop.f32.mrf.mxu0
    %v70 = vadd.f32 %v50, %v69
    %71 = vdwg.mxu0
    %v72 = vadd.f32 %v31, %v70
    %vm73 = vcmask 64512
    %74 = vst.msk [vmem:[#allocation5] sm:$0xff] %vm73, %v72
    // Predicated region
    $region14: #{tpu_custom_call.1} parent=1 // pred_check
      %p75 = pneg %p23
    $region15: #{tpu_custom_call.1} parent=1 // pred_check_branch
      %77 = sbr.rel (%p75) target = $region17
    $region16: #{tpu_custom_call.1} parent=1 // pred_region
      %v78 = vld [vmem:[#allocation5] sm:$0xff]
      %v79 = vmul.f32 %v78, 0.00048828125
      %80 = vst.msk [vmem:[#allocation5] sm:$0xff] %vm73, %v79
    $region17: #{tpu_custom_call.1} parent=1 // pred_fallthru
      _
    // Predicated region
    $region18: #{tpu_custom_call.1} parent=1 // pred_check
      _
    $region19: #{tpu_custom_call.1} parent=1 // pred_check_branch
      %82 = sbr.rel (0) target = $region21
    $region20: #{tpu_custom_call.1} parent=1 // pred_region
      %84 = vsyncadd [#allocation4], 0
      %s86 = sshll.u32 [#allocation5], 4
      %s87 = int_to_ptr.vmem [resolvable:$true] %s86
      %s88 = sshll.u32 %s1, 4
      %s89 = int_to_ptr.hbm [resolvable:$true] %s88
      %91 = dma.vmem_to_hbm [thread:$0]  %s87, 128, %s89, [#allocation4]
    $region21: #{tpu_custom_call.1} parent=1 // pred_fallthru
      _
    // Predicated region
    $region22: #{tpu_custom_call.1} parent=1 // pred_check
      _
    $region23: #{tpu_custom_call.1} parent=1 // pred_check_branch
      %93 = sbr.rel (0) target = $region25
    $region24: #{tpu_custom_call.1} parent=1 // pred_region
      %95 = dma.done [#allocation4], 128
    $region25: #{tpu_custom_call.1} parent=1 // pred_fallthru
      _
    %96 = vsyncpa [#allocation3], 1
    %97 = vsyncpa [#allocation4], 1

</llo_original>
